<compile_context>
chip_gen: v7x
topology: tpu7x:2x2x1
jax: 0.10.0
libtpu: 0.0.40
codegen_flags: <defaults>
</compile_context>

<pallas_src>
import jax
import jax.numpy as jnp
from jax import lax
from jax.experimental import pallas as pl
from jax.experimental.pallas import tpu as pltpu

# ----------------------------- problem sizes --------------------------------
B, G, S, H, V = 2, 8, 16, 32, 64       # batch, group, seq, hidden, vocab
PAD_ID = 1                             # RoBERTa pad token id
TEMP = 0.07                            # similarity temperature
BG = B * G                             # unique sequences (module dups x2)

assert (G & (G - 1)) == 0, "G must be a power of two for the bit-mask batch test"
G_SHIFT = G.bit_length() - 1

# The x2 input duplication is deduplicated (z1 == z2, cls logits == copy 0).
# Only valid while the encoder path is deterministic (eval mode, dropout is
# identity).  Guard so reintroducing stochasticity fails loudly.
ENCODER_IS_DETERMINISTIC = True


# ----------------------- single fused forward kernel ------------------------
def fused_forward_kernel(tok_ref, lab_ref, embw1_ref, wpd_ref, bias_ref,
                         loss_ref, prob_ref):
    # ---- synthetic encoder on CLS rows; gather fused as one-hot MXU matmul -
    # TODO(synk): external RoBERTa encoder replaced by a deterministic
    # synthetic per-token 1-layer encoder; only the CLS row feeds the pooler
    # and the classification head, so only that row is encoded.
    ids = tok_ref[:, 0:1]                                            # (BG,1) i32
    lane = lax.broadcasted_iota(jnp.int32, (BG, V), 1)
    onehot = ((ids == lane) & (ids != PAD_ID)).astype(jnp.float32)   # (BG,V)

    b1 = bias_ref[0:1, :H]                                           # (1,H)
    # embw1 = emb @ W1 folded at init, so this matmul is gather + encoder.
    hidden = jnp.tanh(
        jnp.dot(onehot, embw1_ref[...], preferred_element_type=jnp.float32)
        + b1)                                                        # (BG,H)

    # ---- packed pooler + cls-head dense: one MXU matmul ---------------------
    bpd = bias_ref[1:2, :]                                           # (1,2H)
    pd = jnp.tanh(
        jnp.dot(hidden, wpd_ref[...], preferred_element_type=jnp.float32)
        + bpd)                                                       # (BG,2H)
    pooler = pd[:, :H]                                               # (BG,H) lane 0..H-1, no shift

    # cls-head out_proj (num_labels=1): zero-padded wo -> pure VPU lane reduce
    wo_pad = bias_ref[2:3, :]                                        # (1,2H) zeros in lanes <H
    bo = bias_ref[3:4, 0:1]                                          # (1,1)
    logits = jnp.sum(pd * wo_pad, axis=-1, keepdims=True) + bo       # (BG,1)

    # ---- CLR term: single flat Gram matmul, batch structure in the masks ---
    # z1 == z2 == pooler (inputs duplicated verbatim, deterministic encoder).
    gram = lax.dot_general(pooler, pooler, (((1,), (1,)), ((), ())),
                           preferred_element_type=jnp.float32)       # (BG,BG)

    r = lax.broadcasted_iota(jnp.int32, (BG, BG), 0)
    c = lax.broadcasted_iota(jnp.int32, (BG, BG), 1)
    diag = r == c
    same_batch = (r >> G_SHIFT) == (c >> G_SHIFT)
    row0 = (r & (G - 1)) == 0
    col0 = (c & (G - 1)) == 0
    # eye(G) with row 0 / col 0 forced to 1, restricted to the same batch;
    # cross-batch entries get -1e9 too -> exp underflows to exactly 0, so the
    # per-row softmax equals the original per-batch softmax.
    keep = diag | (same_batch & (row0 | col0))

    # Both norm factors from ONE source (Gram diagonal): exact symmetry and
    # diag cos_sim == dot / |z|^2 as in the torch reference.
    gdiag = jnp.where(diag, gram, 0.0)
    nsq_row = jnp.sum(gdiag, axis=1, keepdims=True)                  # (BG,1)  lane reduce
    nsq_col = jnp.sum(gdiag, axis=0, keepdims=True)                  # (1,BG)  sublane reduce
    denom = jnp.sqrt(nsq_row * nsq_col)                              # (BG,BG)
    cos_sim = (gram / jnp.maximum(denom, 1e-8)) / TEMP               # torch sem.

    masked = jnp.where(keep, cos_sim, jnp.float32(-1e9))

    # log_softmax over columns; NLL with labels = arange(G) -> diagonal terms
    m = jnp.max(masked, axis=-1, keepdims=True)
    lse = m + jnp.log(jnp.sum(jnp.exp(masked - m), axis=-1, keepdims=True))
    logp = masked - lse
    nll = jnp.sum(jnp.where(diag, logp, 0.0), axis=-1, keepdims=True)  # (BG,1)
    clr_loss = -jnp.sum(nll, axis=0, keepdims=True) / BG               # (1,1)

    # ---- cls loss: sigmoid + manual eps-BCE (matches the module) ------------
    prob = jax.nn.sigmoid(logits)                                    # (BG,1)
    prob_ref[...] = prob
    lab = lab_ref[...]                                               # (BG,1)
    bce = -(jnp.log(prob + 1e-10) * lab
            + jnp.log(1.0 - prob + 1e-10) * (1.0 - lab))
    cls_loss = jnp.sum(bce, axis=0, keepdims=True) / BG              # (1,1)

    loss_ref[...] = clr_loss + cls_loss


def fused_forward(tokens, labels_f, embw1, wpd, bias_pack):
    vmem = pl.BlockSpec(memory_space=pltpu.MemorySpace.VMEM)
    return pl.pallas_call(
        fused_forward_kernel,
        out_shape=(jax.ShapeDtypeStruct((1, 1), jnp.float32),        # loss
                   jax.ShapeDtypeStruct((BG, 1), jnp.float32)),      # prob
        in_specs=[vmem] * 5,
        out_specs=(vmem, vmem),
    )(tokens, labels_f, embw1, wpd, bias_pack)


# ------------------------------ parameters ----------------------------------
def init_params(key):
    ks = jax.random.split(key, 7)

    def w(k, shape, scale=0.08):
        return jax.random.normal(k, shape, jnp.float32) * scale

    raw = dict(
        emb=w(ks[0], (V, H), 0.5),
        W1=w(ks[1], (H, H)), b1=jnp.zeros((1, H), jnp.float32),
        Wp=w(ks[2], (H, H)), bp=w(ks[3], (1, H), 0.01),
        Wd=w(ks[4], (H, H)), bd=w(ks[5], (1, H), 0.01),
        Wo=w(ks[6], (H, 1)), bo=jnp.zeros((1, 1), jnp.float32),
    )

    zH = jnp.zeros((1, H), jnp.float32)
    packed = dict(
        # gather + encoder fold: x_cls @ W1 == onehot @ (emb @ W1)
        embw1=raw['emb'] @ raw['W1'],                                # (V,H)
        # pooler dense and cls-head dense packed into one matmul operand
        wpd=jnp.concatenate([raw['Wp'], raw['Wd']], axis=1),         # (H,2H)
        # one small VMEM buffer for every bias / row vector (one DMA):
        #   row0 = b1 (lanes 0..H-1), row1 = [bp|bd], row2 = wo zero-padded,
        #   row3 = bo at lane 0.
        bias=jnp.concatenate([
            jnp.concatenate([raw['b1'], zH], axis=1),
            jnp.concatenate([raw['bp'], raw['bd']], axis=1),
            jnp.concatenate([zH, raw['Wo'].T], axis=1),
            jnp.concatenate([raw['bo'],
                             jnp.zeros((1, 2 * H - 1), jnp.float32)], axis=1),
        ], axis=0),                                                  # (4,2H)
    )
    return raw, packed


# ------------------------------ forward pass ---------------------------------
@jax.jit
def model_with_clr_forward(group_inputs, group_labels, packed):
    assert ENCODER_IS_DETERMINISTIC, (
        "x2-duplication dedup (z1 == z2) only valid with a deterministic "
        "encoder; revert the dedup if dropout / noise is reintroduced.")
    # Only metadata reshapes + the float cast the return contract needs;
    # everything else (gather, masks, matmuls, losses) lives in the kernel.
    tokens = group_inputs.reshape(BG, S)                             # contiguous reshape
    labels_f = group_labels.reshape(-1).astype(jnp.float32)          # (BG,)
    loss, prob = fused_forward(tokens, labels_f.reshape(BG, 1),
                               packed['embw1'], packed['wpd'], packed['bias'])
    return loss[0, 0], prob, labels_f


# ---------------------- pure-JAX reference (torch semantics) -----------------
def reference_forward(group_inputs, group_labels, raw):
    dup = jnp.concatenate([group_inputs, group_inputs], axis=1)      # repeat(1,2,1)
    input_ids = dup.reshape(-1, S)                                   # (2BG,S)
    cls_ids = input_ids[:, 0]
    mask = (cls_ids != PAD_ID).astype(jnp.float32)[:, None]
    x_cls = raw['emb'][cls_ids] * mask
    hidden = jnp.tanh(x_cls @ raw['W1'] + raw['b1'])
    pooler = jnp.tanh(hidden @ raw['Wp'] + raw['bp'])                # (2BG,H)
    head = jnp.tanh(hidden @ raw['Wd'] + raw['bd'])
    cls_out = head @ raw['Wo'] + raw['bo']                           # (2BG,1)
    cls_out = cls_out.reshape(B, 2, G, 1)[:, 0].reshape(BG, 1)

    z = pooler.reshape(B, 2, G, H)
    z1, z2 = z[:, 0], z[:, 1]
    dots = jnp.einsum('bgh,bkh->bgk', z1, z2)
    n1 = jnp.linalg.norm(z1, axis=-1)[:, :, None]
    n2 = jnp.linalg.norm(z2, axis=-1)[:, None, :]
    cos = dots / jnp.maximum(n1 * n2, 1e-8) / TEMP
    keep = jnp.eye(G).at[0, :].set(1.0).at[:, 0].set(1.0)
    keep = jnp.broadcast_to(keep, (B, G, G))
    masked = jnp.where(keep == 0, -1e9, cos)
    logp = jax.nn.log_softmax(masked, axis=2)
    clr_loss = -jnp.mean(jnp.diagonal(logp, axis1=1, axis2=2))

    labels = group_labels.reshape(-1).astype(jnp.float32)
    prob = jax.nn.sigmoid(cls_out)
    cls_loss = -jnp.mean(jnp.log(prob[:, 0] + 1e-10) * labels
                         + jnp.log(1.0 - prob[:, 0] + 1e-10) * (1.0 - labels))
    return clr_loss + cls_loss, prob, labels


# --------------------------------- main --------------------------------------
if __name__ == "__main__":
    key = jax.random.PRNGKey(0)
    k_par, k_ids, k_lab = jax.random.split(key, 3)

    raw, packed = init_params(k_par)
    group_inputs = jax.random.randint(k_ids, (B, G, S), 0, V, dtype=jnp.int32)
    group_labels = jax.random.randint(k_lab, (B, G), 0, 2, dtype=jnp.int32)

    loss, prob, labels = model_with_clr_forward(group_inputs, group_labels, packed)
    jax.block_until_ready((loss, prob, labels))

    ref_loss, ref_prob, ref_labels = reference_forward(group_inputs, group_labels, raw)

    assert prob.shape == (BG, 1) and labels.shape == (BG,)
    assert jnp.isfinite(loss)
    assert jnp.allclose(loss, ref_loss, rtol=1e-4, atol=1e-3), (loss, ref_loss)
    assert jnp.allclose(prob, ref_prob, rtol=1e-4, atol=1e-5)
    assert jnp.allclose(labels, ref_labels)
    print("KERNEL_OK")
</pallas_src>

<mosaic_0001>
module attributes {stable_mosaic.version = 11 : i64} {
  func.func @fused_forward_kernel(%arg0: memref<16x16xi32, #tpu.memory_space<vmem>>, %arg1: memref<16x1xf32, #tpu.memory_space<vmem>>, %arg2: memref<64x32xf32, #tpu.memory_space<vmem>>, %arg3: memref<32x64xf32, #tpu.memory_space<vmem>>, %arg4: memref<4x64xf32, #tpu.memory_space<vmem>>, %arg5: memref<1x1xf32, #tpu.memory_space<vmem>>, %arg6: memref<16x1xf32, #tpu.memory_space<vmem>>) attributes {dimension_semantics = [], scalar_prefetch = 0 : i64, scratch_operands = 0 : i64, tpu.core_type = #tpu.core_type<tc>} {
    %c0 = arith.constant 0 : index
    %c0_0 = arith.constant 0 : index
    %0 = vector.load %arg0[%c0, %c0_0] : memref<16x16xi32, #tpu.memory_space<vmem>>, vector<16x1xi32>
    %1 = tpu.iota {dimensions = array<i32: 1>} : vector<16x64xi32>
    %2 = vector.broadcast %0 : vector<16x1xi32> to vector<16x64xi32>
    %3 = arith.cmpi eq, %2, %1 : vector<16x64xi32>
    %c1_i32 = arith.constant 1 : i32
    %4 = vector.broadcast %c1_i32 : i32 to vector<16x1xi32>
    %5 = arith.cmpi ne, %0, %4 : vector<16x1xi32>
    %6 = vector.broadcast %5 : vector<16x1xi1> to vector<16x64xi1>
    %7 = arith.andi %3, %6 : vector<16x64xi1>
    %8 = arith.extui %7 : vector<16x64xi1> to vector<16x64xi32>
    %9 = arith.sitofp %8 : vector<16x64xi32> to vector<16x64xf32>
    %c0_1 = arith.constant 0 : index
    %c0_2 = arith.constant 0 : index
    %10 = vector.load %arg4[%c0_1, %c0_2] : memref<4x64xf32, #tpu.memory_space<vmem>>, vector<1x32xf32>
    %c0_3 = arith.constant 0 : index
    %c0_4 = arith.constant 0 : index
    %11 = vector.load %arg2[%c0_3, %c0_4] : memref<64x32xf32, #tpu.memory_space<vmem>>, vector<64x32xf32>
    %cst = arith.constant dense<0.000000e+00> : vector<16x32xf32>
    %12 = tpu.matmul %9, %11, %cst {dimension_numbers = #tpu.dot_dimension_numbers<[1], [0], [0], [1], [0, 0, 1, 1], [], []>} : vector<16x64xf32>, vector<64x32xf32>, vector<16x32xf32> -> vector<16x32xf32>
    %13 = vector.broadcast %10 : vector<1x32xf32> to vector<16x32xf32>
    %14 = arith.addf %12, %13 : vector<16x32xf32>
    %15 = math.tanh %14 : vector<16x32xf32>
    %c1 = arith.constant 1 : index
    %c0_5 = arith.constant 0 : index
    %16 = vector.load %arg4[%c1, %c0_5] : memref<4x64xf32, #tpu.memory_space<vmem>>, vector<1x64xf32>
    %c0_6 = arith.constant 0 : index
    %c0_7 = arith.constant 0 : index
    %17 = vector.load %arg3[%c0_6, %c0_7] : memref<32x64xf32, #tpu.memory_space<vmem>>, vector<32x64xf32>
    %cst_8 = arith.constant dense<0.000000e+00> : vector<16x64xf32>
    %18 = tpu.matmul %15, %17, %cst_8 {dimension_numbers = #tpu.dot_dimension_numbers<[1], [0], [0], [1], [0, 0, 1, 1], [], []>} : vector<16x32xf32>, vector<32x64xf32>, vector<16x64xf32> -> vector<16x64xf32>
    %19 = vector.broadcast %16 : vector<1x64xf32> to vector<16x64xf32>
    %20 = arith.addf %18, %19 : vector<16x64xf32>
    %21 = math.tanh %20 : vector<16x64xf32>
    %22 = vector.extract_strided_slice %21 {offsets = [0, 0], sizes = [16, 32], strides = [1, 1]} : vector<16x64xf32> to vector<16x32xf32>
    %c2 = arith.constant 2 : index
    %c0_9 = arith.constant 0 : index
    %23 = vector.load %arg4[%c2, %c0_9] : memref<4x64xf32, #tpu.memory_space<vmem>>, vector<1x64xf32>
    %c3 = arith.constant 3 : index
    %c0_10 = arith.constant 0 : index
    %24 = vector.load %arg4[%c3, %c0_10] : memref<4x64xf32, #tpu.memory_space<vmem>>, vector<1x1xf32>
    %25 = vector.broadcast %23 : vector<1x64xf32> to vector<16x64xf32>
    %26 = arith.mulf %21, %25 : vector<16x64xf32>
    %cst_11 = arith.constant dense<0.000000e+00> : vector<16xf32>
    %27 = vector.multi_reduction <add>, %26, %cst_11 [1] : vector<16x64xf32> to vector<16xf32>
    %28 = vector.shape_cast %27 : vector<16xf32> to vector<16x1xf32>
    %29 = vector.broadcast %24 : vector<1x1xf32> to vector<16x1xf32>
    %30 = arith.addf %28, %29 : vector<16x1xf32>
    %cst_12 = arith.constant dense<0.000000e+00> : vector<16x16xf32>
    %31 = tpu.matmul %22, %22, %cst_12 {dimension_numbers = #tpu.dot_dimension_numbers<[1], [1], [0], [0], [0, 0, 1, 0], [], []>} : vector<16x32xf32>, vector<16x32xf32>, vector<16x16xf32> -> vector<16x16xf32>
    %32 = tpu.iota {dimensions = array<i32: 0>} : vector<16x16xi32>
    %33 = tpu.iota {dimensions = array<i32: 1>} : vector<16x16xi32>
    %34 = arith.cmpi eq, %32, %33 : vector<16x16xi32>
    %c3_i32 = arith.constant 3 : i32
    %35 = vector.broadcast %c3_i32 : i32 to vector<16x16xi32>
    %36 = arith.shrsi %32, %35 : vector<16x16xi32>
    %c3_i32_13 = arith.constant 3 : i32
    %37 = vector.broadcast %c3_i32_13 : i32 to vector<16x16xi32>
    %38 = arith.shrsi %33, %37 : vector<16x16xi32>
    %39 = arith.cmpi eq, %36, %38 : vector<16x16xi32>
    %c7_i32 = arith.constant 7 : i32
    %40 = vector.broadcast %c7_i32 : i32 to vector<16x16xi32>
    %41 = arith.andi %32, %40 : vector<16x16xi32>
    %c0_i32 = arith.constant 0 : i32
    %42 = vector.broadcast %c0_i32 : i32 to vector<16x16xi32>
    %43 = arith.cmpi eq, %41, %42 : vector<16x16xi32>
    %c7_i32_14 = arith.constant 7 : i32
    %44 = vector.broadcast %c7_i32_14 : i32 to vector<16x16xi32>
    %45 = arith.andi %33, %44 : vector<16x16xi32>
    %c0_i32_15 = arith.constant 0 : i32
    %46 = vector.broadcast %c0_i32_15 : i32 to vector<16x16xi32>
    %47 = arith.cmpi eq, %45, %46 : vector<16x16xi32>
    %48 = arith.ori %43, %47 : vector<16x16xi1>
    %49 = arith.andi %39, %48 : vector<16x16xi1>
    %50 = arith.ori %34, %49 : vector<16x16xi1>
    %cst_16 = arith.constant 0.000000e+00 : f32
    %51 = vector.broadcast %cst_16 : f32 to vector<16x16xf32>
    %52 = arith.select %34, %31, %51 : vector<16x16xi1>, vector<16x16xf32>
    %cst_17 = arith.constant dense<0.000000e+00> : vector<16xf32>
    %53 = vector.multi_reduction <add>, %52, %cst_17 [1] : vector<16x16xf32> to vector<16xf32>
    %54 = vector.shape_cast %53 : vector<16xf32> to vector<16x1xf32>
    %cst_18 = arith.constant dense<0.000000e+00> : vector<16xf32>
    %55 = vector.multi_reduction <add>, %52, %cst_18 [0] : vector<16x16xf32> to vector<16xf32>
    %56 = vector.shape_cast %55 : vector<16xf32> to vector<1x16xf32>
    %57 = vector.broadcast %54 : vector<16x1xf32> to vector<16x16xf32>
    %58 = vector.broadcast %56 : vector<1x16xf32> to vector<16x16xf32>
    %59 = arith.mulf %57, %58 : vector<16x16xf32>
    %60 = math.sqrt %59 : vector<16x16xf32>
    %cst_19 = arith.constant 9.99999993E-9 : f32
    %61 = vector.broadcast %cst_19 : f32 to vector<16x16xf32>
    %62 = arith.maximumf %60, %61 : vector<16x16xf32>
    %63 = arith.divf %31, %62 : vector<16x16xf32>
    %cst_20 = arith.constant 7.000000e-02 : f32
    %64 = vector.broadcast %cst_20 : f32 to vector<16x16xf32>
    %65 = arith.divf %63, %64 : vector<16x16xf32>
    %cst_21 = arith.constant -1.000000e+09 : f32
    %66 = vector.broadcast %cst_21 : f32 to vector<16x16xf32>
    %67 = arith.select %50, %65, %66 : vector<16x16xi1>, vector<16x16xf32>
    %cst_22 = arith.constant dense<0xFF800000> : vector<16xf32>
    %68 = vector.multi_reduction <maximumf>, %67, %cst_22 [1] : vector<16x16xf32> to vector<16xf32>
    %69 = vector.shape_cast %68 : vector<16xf32> to vector<16x1xf32>
    %70 = vector.broadcast %69 : vector<16x1xf32> to vector<16x16xf32>
    %71 = arith.subf %67, %70 : vector<16x16xf32>
    %72 = math.exp %71 : vector<16x16xf32>
    %cst_23 = arith.constant dense<0.000000e+00> : vector<16xf32>
    %73 = vector.multi_reduction <add>, %72, %cst_23 [1] : vector<16x16xf32> to vector<16xf32>
    %74 = vector.shape_cast %73 : vector<16xf32> to vector<16x1xf32>
    %75 = math.log %74 : vector<16x1xf32>
    %76 = arith.addf %69, %75 : vector<16x1xf32>
    %77 = vector.broadcast %76 : vector<16x1xf32> to vector<16x16xf32>
    %78 = arith.subf %67, %77 : vector<16x16xf32>
    %cst_24 = arith.constant 0.000000e+00 : f32
    %79 = vector.broadcast %cst_24 : f32 to vector<16x16xf32>
    %80 = arith.select %34, %78, %79 : vector<16x16xi1>, vector<16x16xf32>
    %cst_25 = arith.constant dense<0.000000e+00> : vector<16xf32>
    %81 = vector.multi_reduction <add>, %80, %cst_25 [1] : vector<16x16xf32> to vector<16xf32>
    %82 = vector.shape_cast %81 : vector<16xf32> to vector<16x1xf32>
    %cst_26 = arith.constant dense<0.000000e+00> : vector<1xf32>
    %83 = vector.multi_reduction <add>, %82, %cst_26 [0] : vector<16x1xf32> to vector<1xf32>
    %84 = vector.shape_cast %83 : vector<1xf32> to vector<1x1xf32>
    %cst_27 = arith.constant 0.000000e+00 : f32
    %85 = vector.broadcast %cst_27 : f32 to vector<1x1xf32>
    %86 = arith.subf %85, %84 : vector<1x1xf32>
    %cst_28 = arith.constant 1.600000e+01 : f32
    %87 = vector.broadcast %cst_28 : f32 to vector<1x1xf32>
    %88 = arith.divf %86, %87 : vector<1x1xf32>
    %89 = arith.negf %30 : vector<16x1xf32>
    %90 = math.exp %89 : vector<16x1xf32>
    %cst_29 = arith.constant 1.000000e+00 : f32
    %91 = vector.broadcast %cst_29 : f32 to vector<16x1xf32>
    %92 = arith.addf %91, %90 : vector<16x1xf32>
    %93 = arith.divf %91, %92 : vector<16x1xf32>
    %c0_30 = arith.constant 0 : index
    %c0_31 = arith.constant 0 : index
    %94 = vector.load %arg6[%c0_30, %c0_31] : memref<16x1xf32, #tpu.memory_space<vmem>>, vector<16x1xf32>
    tpu.vector_store %arg6[%c0_30, %c0_31], %93 {strides = array<i32>} : memref<16x1xf32, #tpu.memory_space<vmem>>, vector<16x1xf32>,
    %c0_32 = arith.constant 0 : index
    %c0_33 = arith.constant 0 : index
    %95 = vector.load %arg1[%c0_32, %c0_33] : memref<16x1xf32, #tpu.memory_space<vmem>>, vector<16x1xf32>
    %cst_34 = arith.constant 1.000000e-10 : f32
    %96 = vector.broadcast %cst_34 : f32 to vector<16x1xf32>
    %97 = arith.addf %93, %96 : vector<16x1xf32>
    %98 = math.log %97 : vector<16x1xf32>
    %99 = arith.mulf %98, %95 : vector<16x1xf32>
    %cst_35 = arith.constant 1.000000e+00 : f32
    %100 = vector.broadcast %cst_35 : f32 to vector<16x1xf32>
    %101 = arith.subf %100, %93 : vector<16x1xf32>
    %cst_36 = arith.constant 1.000000e-10 : f32
    %102 = vector.broadcast %cst_36 : f32 to vector<16x1xf32>
    %103 = arith.addf %101, %102 : vector<16x1xf32>
    %104 = math.log %103 : vector<16x1xf32>
    %cst_37 = arith.constant 1.000000e+00 : f32
    %105 = vector.broadcast %cst_37 : f32 to vector<16x1xf32>
    %106 = arith.subf %105, %95 : vector<16x1xf32>
    %107 = arith.mulf %104, %106 : vector<16x1xf32>
    %108 = arith.addf %99, %107 : vector<16x1xf32>
    %cst_38 = arith.constant 0.000000e+00 : f32
    %109 = vector.broadcast %cst_38 : f32 to vector<16x1xf32>
    %110 = arith.subf %109, %108 : vector<16x1xf32>
    %cst_39 = arith.constant dense<0.000000e+00> : vector<1xf32>
    %111 = vector.multi_reduction <add>, %110, %cst_39 [0] : vector<16x1xf32> to vector<1xf32>
    %112 = vector.shape_cast %111 : vector<1xf32> to vector<1x1xf32>
    %cst_40 = arith.constant 1.600000e+01 : f32
    %113 = vector.broadcast %cst_40 : f32 to vector<1x1xf32>
    %114 = arith.divf %112, %113 : vector<1x1xf32>
    %115 = arith.addf %88, %114 : vector<1x1xf32>
    %c0_41 = arith.constant 0 : index
    %c0_42 = arith.constant 0 : index
    %116 = vector.load %arg5[%c0_41, %c0_42] : memref<1x1xf32, #tpu.memory_space<vmem>>, vector<1x1xf32>
    tpu.vector_store %arg5[%c0_41, %c0_42], %115 {strides = array<i32>} : memref<1x1xf32, #tpu.memory_space<vmem>>, vector<1x1xf32>,
    return
  }
}

</mosaic_0001>

<llo_original>
// kernel: model_with_clr_forward.1
$region0: #{model_with_clr_forward.1}
  #allocation0 [shape = 'u32[]', space=smem, size = 0x4, offset = 0x4, fixed_abs, tag = 'smem constant byte address 0x4 - core index']
  #allocation1 [shape = 'u32[144,128]{1,0:T(1,128)}', space=vmem, size = 0x12000, scoped, tag = 'internal scratch']
  %s0 = inlined_call_operand.vmem [shape: s32[16,16], index: 0, kind: input, shape index: {}]
  %s1 = inlined_call_operand.vmem [shape: f32[16,1], index: 1, kind: input, shape index: {}]
  %s2 = inlined_call_operand.vmem [shape: f32[64,32], index: 2, kind: input, shape index: {}]
  %s3 = inlined_call_operand.vmem [shape: f32[32,64], index: 3, kind: input, shape index: {}]
  %s4 = inlined_call_operand.vmem [shape: f32[4,64], index: 4, kind: input, shape index: {}]
  %s5 = inlined_call_operand.hbm [shape: f32[1,1], index: 5, kind: output, shape index: {0}]
  %s6 = inlined_call_operand.vmem [shape: f32[16,1], index: 6, kind: output, shape index: {1}]
  %7 = xla_tuple %s5, %s6
  %s8 = sld [smem:[#allocation0]]
  $region38: #{model_with_clr_forward.1} parent=0
    _
  %s10 = ssub.s32 1, %s8
  %s11 = scalar_select 0, %s10, %s8
  $region1: #{model_with_clr_forward.1} parent=0
    #allocation2 [shape = 'u8[512]{0}', space=vmem, size = 0x400, scoped, tag = 'output window, operand 0, single buffered']
    #allocation3 [shape = 's32[1]{0}', space=sflag, size = 0x4, scoped, tag = 'scoped memory for model_with_clr_forward.1']
    %12 = vsyncpa [#allocation3], 0
    // Predicated region
    $region2: #{model_with_clr_forward.1} parent=1 // pred_check
      _
    $region3: #{model_with_clr_forward.1} parent=1 // pred_check_branch
      %14 = sbr.rel (0) target = $region5
    $region4: #{model_with_clr_forward.1} parent=1 // pred_region
      _
    $region5: #{model_with_clr_forward.1} parent=1 // pred_fallthru
      _
    // Predicated region
    $region6: #{model_with_clr_forward.1} parent=1 // pred_check
      _
    $region7: #{model_with_clr_forward.1} parent=1 // pred_check_branch
      %16 = sbr.rel (0) target = $region9
    $region8: #{model_with_clr_forward.1} parent=1 // pred_region
      _
    $region9: #{model_with_clr_forward.1} parent=1 // pred_fallthru
      _
    // Predicated region
    $region10: #{model_with_clr_forward.1} parent=1 // pred_check
      _
    $region11: #{model_with_clr_forward.1} parent=1 // pred_check_branch
      %18 = sbr.rel (0) target = $region13
    $region12: #{model_with_clr_forward.1} parent=1 // pred_region
      _
    $region13: #{model_with_clr_forward.1} parent=1 // pred_fallthru
      _
    // Predicated region
    $region14: #{model_with_clr_forward.1} parent=1 // pred_check
      _
    $region15: #{model_with_clr_forward.1} parent=1 // pred_check_branch
      %20 = sbr.rel (0) target = $region17
    $region16: #{model_with_clr_forward.1} parent=1 // pred_region
      _
    $region17: #{model_with_clr_forward.1} parent=1 // pred_fallthru
      _
    // Predicated region
    $region18: #{model_with_clr_forward.1} parent=1 // pred_check
      _
    $region19: #{model_with_clr_forward.1} parent=1 // pred_check_branch
      %22 = sbr.rel (0) target = $region21
    $region20: #{model_with_clr_forward.1} parent=1 // pred_region
      _
    $region21: #{model_with_clr_forward.1} parent=1 // pred_fallthru
      _
    %v23 = vld [vmem:[%s0] sm:$0xff]
    %v24 = vld [vmem:[%s0 + $0x8] sm:$0xff]
    %v25 = vlaneseq
    %v26 = vand.u32 %v25, 127
    %27 = vset.pattern.permute.xlu0 0
    %28 = vperm.xlu0 %27, %v23
    %v29 = vpop.permute.xlu0 %28
    %30 = vset.pattern.permute.xlu0 0
    %31 = vperm.xlu0 %30, %v24
    %v32 = vpop.permute.xlu0 %31
    %vm33 = vcmp.eq.s32.totalorder %v29, %v26
    %vm34 = vcmp.eq.s32.totalorder %v32, %v26
    %vm35 = vcmp.ne.s32.totalorder %v23, 1
    %vm36 = vcmp.ne.s32.totalorder %v24, 1
    %v37 = vsel %vm35, 1, 0
    %v38 = vsel %vm36, 1, 0
    %39 = vset.pattern.permute.xlu0 0
    %40 = vperm.xlu0 %39, %v37
    %v41 = vpop.permute.xlu0 %40
    %42 = vset.pattern.permute.xlu0 0
    %43 = vperm.xlu0 %42, %v38
    %v44 = vpop.permute.xlu0 %43
    %vm45 = vcmp.eq.s32.totalorder %v41, 1
    %vm46 = vcmp.eq.s32.totalorder %v44, 1
    %vm47 = vmand %vm33, %vm45
    %vm48 = vmand %vm34, %vm46
    %v49 = vsel %vm47, 1, 0
    %v50 = vsel %vm48, 1, 0
    %v51 = vcvt.s32.f32 %v49
    %v52 = vcvt.s32.f32 %v50
    %v53 = vld [vmem:[%s4] sm:$0x1]
    %v54 = vld [vmem:[%s2] sm:$0xff]
    %v55 = vld [vmem:[%s2 + $0x8] sm:$0xff]
    %v56 = vld [vmem:[%s2 + $0x10] sm:$0xff]
    %v57 = vld [vmem:[%s2 + $0x18] sm:$0xff]
    %v58 = vld [vmem:[%s2 + $0x20] sm:$0xff]
    %v59 = vld [vmem:[%s2 + $0x28] sm:$0xff]
    %v60 = vld [vmem:[%s2 + $0x30] sm:$0xff]
    %v61 = vld [vmem:[%s2 + $0x38] sm:$0xff]
    %v62 = vlaneseq
    %v63 = vshrl.u32 %v62, 7
    %v64 = vsub.s32 0, %v63
    %v65 = vrot.slane %v53, %v64
    %vm66 = vcmask 523264
    %v68 = vsel %vm66, %v51, 0
    %v71 = vsel %vm66, %v52, 0
    %73 = vmatprep.subr.mxu0 0.0
    %74 = vmatpush1.msra.mxu0 %v54
    %75 = vmatprep.subr.mxu0 0.0
    %76 = vmatpush1.msra.mxu0 %v55
    %77 = vmatprep.subr.mxu0 0.0
    %78 = vmatpush1.msra.mxu0 %v56
    %79 = vmatprep.subr.mxu0 0.0
    %80 = vmatpush1.msra.mxu0 %v57
    %81 = vmatprep.subr.mxu0 0.0
    %82 = vmatpush1.msra.mxu0 %v58
    %83 = vmatprep.subr.mxu0 0.0
    %84 = vmatpush1.msra.mxu0 %v59
    %85 = vmatprep.subr.mxu0 0.0
    %86 = vmatpush1.msra.mxu0 %v60
    %87 = vmatprep.subr.mxu0 0.0
    %88 = vmatpush1.msra.mxu0 %v61
    %89 = vmatprep.subr.mxu0 0.0
    %90 = vmatpush1.msra.mxu0 0.0
    %91 = vmatprep.subr.mxu0 0.0
    %92 = vmatpush1.msra.mxu0 0.0
    %93 = vmatprep.subr.mxu0 0.0
    %94 = vmatpush1.msra.mxu0 0.0
    %95 = vmatprep.subr.mxu0 0.0
    %96 = vmatpush1.msra.mxu0 0.0
    %97 = vmatprep.subr.mxu0 0.0
    %98 = vmatpush1.msra.mxu0 0.0
    %99 = vmatprep.subr.mxu0 0.0
    %100 = vmatpush1.msra.mxu0 0.0
    %101 = vmatprep.subr.mxu0 0.0
    %102 = vmatpush1.msra.mxu0 0.0
    %103 = vmatprep.subr.mxu0 0.0
    %104 = vmatpush1.msra.mxu0 0.0
    %105 = vmatprep.subr.mxu0 0.0
    %106 = vmatpush1.msra.mxu0 0.0
    %107 = vmatprep.subr.mxu0 0.0
    %108 = vmatpush1.msra.mxu0 0.0
    %109 = vmatprep.subr.mxu0 0.0
    %110 = vmatpush1.msra.mxu0 0.0
    %111 = vmatprep.subr.mxu0 0.0
    %112 = vmatpush1.msra.mxu0 0.0
    %113 = vmatprep.subr.mxu0 0.0
    %114 = vmatpush1.msra.mxu0 0.0
    %115 = vmatprep.subr.mxu0 0.0
    %116 = vmatpush1.msra.mxu0 0.0
    %117 = vmatprep.subr.mxu0 0.0
    %118 = vmatpush1.msra.mxu0 0.0
    %119 = vmatprep.subr.mxu0 0.0
    %120 = vmatpush1.msra.mxu0 0.0
    %121 = vmatprep.subr.mxu0 0.0
    %122 = vmatpush1.msra.mxu0 0.0
    %123 = vmatprep.subr.mxu0 0.0
    %124 = vmatpush1.msra.mxu0 0.0
    %125 = vmatprep.subr.mxu0 0.0
    %126 = vmatpush1.msra.mxu0 0.0
    %127 = vmatprep.subr.mxu0 0.0
    %128 = vmatpush1.msra.mxu0 0.0
    %129 = vmatprep.subr.mxu0 0.0
    %130 = vmatpush1.msra.mxu0 0.0
    %131 = vmatprep.subr.mxu0 0.0
    %132 = vmatpush1.msra.mxu0 0.0
    %133 = vmatprep.subr.mxu0 0.0
    %134 = vmatpush1.msra.mxu0 0.0
    %135 = vmatprep.subr.mxu0 0.0
    %136 = vmatpush1.msra.mxu0 0.0
    %137 = vmatprep.mubr.f32.mxu0 0.0
    %138 = vmatmul.mubr.f32.gmra.mrb[0].mxu0 %v68
    %v139 = vpop.f32.mrb[0].mxu0
    %v140 = vadd.f32 %v65, %v139
    %v141 = vpop.f32.mrb[0].mxu0
    %142 = vmatprep.mubr.f32.mxu0 0.0
    %143 = vmatmul.mubr.f32.gmra.mrb[0].mxu0 %v71
    %v144 = vpop.f32.mrb[0].mxu0
    %v145 = vadd.f32 %v65, %v144
    %v146 = vpop.f32.mrb[0].mxu0
    %147 = vdwg.mxu0
    %v148 = vtanh.pop %v140
    %v149 = vtanh.pop %v145
    %v150 = vld [vmem:[%s4 + $0x1] sm:$0x1]
    %v151 = vld [vmem:[%s3] sm:$0xff]
    %v152 = vld [vmem:[%s3 + $0x8] sm:$0xff]
    %v153 = vld [vmem:[%s3 + $0x10] sm:$0xff]
    %v154 = vld [vmem:[%s3 + $0x18] sm:$0xff]
    %v155 = vlaneseq
    %v156 = vshrl.u32 %v155, 7
    %v157 = vsub.s32 0, %v156
    %v158 = vrot.slane %v150, %v157
    %vm159 = vcmask 261120
    %v161 = vsel %vm159, %v148, 0
    %v164 = vsel %vm159, %v149, 0
    %166 = vmatprep.subr.mxu0 0.0
    %167 = vmatpush1.msra.mxu0 %v151
    %168 = vmatprep.subr.mxu0 0.0
    %169 = vmatpush1.msra.mxu0 %v152
    %170 = vmatprep.subr.mxu0 0.0
    %171 = vmatpush1.msra.mxu0 %v153
    %172 = vmatprep.subr.mxu0 0.0
    %173 = vmatpush1.msra.mxu0 %v154
    %174 = vmatprep.subr.mxu0 0.0
    %175 = vmatpush1.msra.mxu0 0.0
    %176 = vmatprep.subr.mxu0 0.0
    %177 = vmatpush1.msra.mxu0 0.0
    %178 = vmatprep.subr.mxu0 0.0
    %179 = vmatpush1.msra.mxu0 0.0
    %180 = vmatprep.subr.mxu0 0.0
    %181 = vmatpush1.msra.mxu0 0.0
    %182 = vmatprep.subr.mxu0 0.0
    %183 = vmatpush1.msra.mxu0 0.0
    %184 = vmatprep.subr.mxu0 0.0
    %185 = vmatpush1.msra.mxu0 0.0
    %186 = vmatprep.subr.mxu0 0.0
    %187 = vmatpush1.msra.mxu0 0.0
    %188 = vmatprep.subr.mxu0 0.0
    %189 = vmatpush1.msra.mxu0 0.0
    %190 = vmatprep.subr.mxu0 0.0
    %191 = vmatpush1.msra.mxu0 0.0
    %192 = vmatprep.subr.mxu0 0.0
    %193 = vmatpush1.msra.mxu0 0.0
    %194 = vmatprep.subr.mxu0 0.0
    %195 = vmatpush1.msra.mxu0 0.0
    %196 = vmatprep.subr.mxu0 0.0
    %197 = vmatpush1.msra.mxu0 0.0
    %198 = vmatprep.subr.mxu0 0.0
    %199 = vmatpush1.msra.mxu0 0.0
    %200 = vmatprep.subr.mxu0 0.0
    %201 = vmatpush1.msra.mxu0 0.0
    %202 = vmatprep.subr.mxu0 0.0
    %203 = vmatpush1.msra.mxu0 0.0
    %204 = vmatprep.subr.mxu0 0.0
    %205 = vmatpush1.msra.mxu0 0.0
    %206 = vmatprep.subr.mxu0 0.0
    %207 = vmatpush1.msra.mxu0 0.0
    %208 = vmatprep.subr.mxu0 0.0
    %209 = vmatpush1.msra.mxu0 0.0
    %210 = vmatprep.subr.mxu0 0.0
    %211 = vmatpush1.msra.mxu0 0.0
    %212 = vmatprep.subr.mxu0 0.0
    %213 = vmatpush1.msra.mxu0 0.0
    %214 = vmatprep.subr.mxu0 0.0
    %215 = vmatpush1.msra.mxu0 0.0
    %216 = vmatprep.subr.mxu0 0.0
    %217 = vmatpush1.msra.mxu0 0.0
    %218 = vmatprep.subr.mxu0 0.0
    %219 = vmatpush1.msra.mxu0 0.0
    %220 = vmatprep.subr.mxu0 0.0
    %221 = vmatpush1.msra.mxu0 0.0
    %222 = vmatprep.subr.mxu0 0.0
    %223 = vmatpush1.msra.mxu0 0.0
    %224 = vmatprep.subr.mxu0 0.0
    %225 = vmatpush1.msra.mxu0 0.0
    %226 = vmatprep.subr.mxu0 0.0
    %227 = vmatpush1.msra.mxu0 0.0
    %228 = vmatprep.subr.mxu0 0.0
    %229 = vmatpush1.msra.mxu0 0.0
    %230 = vmatprep.mubr.f32.mxu0 0.0
    %231 = vmatmul.mubr.f32.gmra.mrb[0].mxu0 %v161
    %v232 = vpop.f32.mrb[0].mxu0
    %v233 = vadd.f32 %v158, %v232
    %v234 = vpop.f32.mrb[0].mxu0
    %235 = vmatprep.mubr.f32.mxu0 0.0
    %236 = vmatmul.mubr.f32.gmra.mrb[0].mxu0 %v164
    %v237 = vpop.f32.mrb[0].mxu0
    %v238 = vadd.f32 %v158, %v237
    %v239 = vpop.f32.mrb[0].mxu0
    %240 = vdwg.mxu0
    %v241 = vtanh.pop %v233
    %v242 = vtanh.pop %v238
    %v243 = vld [vmem:[%s4 + $0x2] sm:$0x1]
    %v244 = vld [vmem:[%s4 + $0x3] sm:$0x1]
    %v245 = vlaneseq
    %v246 = vshrl.u32 %v245, 7
    %v247 = vsub.s32 0, %v246
    %v248 = vrot.slane %v243, %v247
    %v249 = vmul.f32 %v241, %v248
    %v250 = vmul.f32 %v242, %v248
    %v251 = vsel %vm66, %v249, 0.0
    %252 = vadd.xlane.f32.xlu0 %v251
    %v253 = vpop.xlane.xlu0 %252
    %v254 = vsel %vm66, %v250, 0.0
    %255 = vadd.xlane.f32.xlu0 %v254
    %v256 = vpop.xlane.xlu0 %255
    %v257 = vlaneseq
    %v258 = vshrl.u32 %v257, 7
    %v259 = vsub.s32 0, %v258
    %v260 = vrot.slane %v244, %v259
    %v261 = vadd.f32 %v253, %v260
    %v262 = vadd.f32 %v256, %v260
    %v264 = vsel %vm159, %v241, 0
    %v267 = vsel %vm159, %v242, 0
    %269 = vmatprep.subr.mxu0 0.0
    %270 = vmatpush1.xpose.msra.mxu0 %v264
    %271 = vmatprep.subr.mxu0 0.0
    %272 = vmatpush1.xpose.msra.mxu0 %v267
    %273 = vmatprep.subr.mxu0 0.0
    %274 = vmatpush1.xpose.msra.mxu0 0.0
    %275 = vmatprep.subr.mxu0 0.0
    %276 = vmatpush1.xpose.msra.mxu0 0.0
    %277 = vmatprep.subr.mxu0 0.0
    %278 = vmatpush1.xpose.msra.mxu0 0.0
    %279 = vmatprep.subr.mxu0 0.0
    %280 = vmatpush1.xpose.msra.mxu0 0.0
    %281 = vmatprep.subr.mxu0 0.0
    %282 = vmatpush1.xpose.msra.mxu0 0.0
    %283 = vmatprep.subr.mxu0 0.0
    %284 = vmatpush1.xpose.msra.mxu0 0.0
    %285 = vmatprep.subr.mxu0 0.0
    %286 = vmatpush1.xpose.msra.mxu0 0.0
    %287 = vmatprep.subr.mxu0 0.0
    %288 = vmatpush1.xpose.msra.mxu0 0.0
    %289 = vmatprep.subr.mxu0 0.0
    %290 = vmatpush1.xpose.msra.mxu0 0.0
    %291 = vmatprep.subr.mxu0 0.0
    %292 = vmatpush1.xpose.msra.mxu0 0.0
    %293 = vmatprep.subr.mxu0 0.0
    %294 = vmatpush1.xpose.msra.mxu0 0.0
    %295 = vmatprep.subr.mxu0 0.0
    %296 = vmatpush1.xpose.msra.mxu0 0.0
    %297 = vmatprep.subr.mxu0 0.0
    %298 = vmatpush1.xpose.msra.mxu0 0.0
    %299 = vmatprep.subr.mxu0 0.0
    %300 = vmatpush1.xpose.msra.mxu0 0.0
    %301 = vmatprep.subr.mxu0 0.0
    %302 = vmatpush1.xpose.msra.mxu0 0.0
    %303 = vmatprep.subr.mxu0 0.0
    %304 = vmatpush1.xpose.msra.mxu0 0.0
    %305 = vmatprep.subr.mxu0 0.0
    %306 = vmatpush1.xpose.msra.mxu0 0.0
    %307 = vmatprep.subr.mxu0 0.0
    %308 = vmatpush1.xpose.msra.mxu0 0.0
    %309 = vmatprep.subr.mxu0 0.0
    %310 = vmatpush1.xpose.msra.mxu0 0.0
    %311 = vmatprep.subr.mxu0 0.0
    %312 = vmatpush1.xpose.msra.mxu0 0.0
    %313 = vmatprep.subr.mxu0 0.0
    %314 = vmatpush1.xpose.msra.mxu0 0.0
    %315 = vmatprep.subr.mxu0 0.0
    %316 = vmatpush1.xpose.msra.mxu0 0.0
    %317 = vmatprep.subr.mxu0 0.0
    %318 = vmatpush1.xpose.msra.mxu0 0.0
    %319 = vmatprep.subr.mxu0 0.0
    %320 = vmatpush1.xpose.msra.mxu0 0.0
    %321 = vmatprep.subr.mxu0 0.0
    %322 = vmatpush1.xpose.msra.mxu0 0.0
    %323 = vmatprep.subr.mxu0 0.0
    %324 = vmatpush1.xpose.msra.mxu0 0.0
    %325 = vmatprep.subr.mxu0 0.0
    %326 = vmatpush1.xpose.msra.mxu0 0.0
    %327 = vmatprep.subr.mxu0 0.0
    %328 = vmatpush1.xpose.msra.mxu0 0.0
    %329 = vmatprep.subr.mxu0 0.0
    %330 = vmatpush1.xpose.msra.mxu0 0.0
    %331 = vmatprep.subr.mxu0 0.0
    %332 = vmatpush1.xpose.msra.mxu0 0.0
    %333 = vmatprep.mubr.f32.mxu0 0.0
    %334 = vmatmul.mubr.f32.gmra.mrb[0].mxu0 %v264
    %v335 = vpop.f32.mrb[0].mxu0
    %v336 = vadd.f32 0.0, %v335
    %v337 = vpop.f32.mrb[0].mxu0
    %338 = vmatprep.mubr.f32.mxu0 0.0
    %339 = vmatmul.mubr.f32.gmra.mrb[0].mxu0 %v267
    %v340 = vpop.f32.mrb[0].mxu0
    %v341 = vadd.f32 0.0, %v340
    %v342 = vpop.f32.mrb[0].mxu0
    %343 = vdwg.mxu0
    %v344 = vlaneseq
    %v345 = vshrl.u32 %v344, 7
    %v346 = vadd.s32 %v345, 8
    %vm347 = vcmp.eq.s32.totalorder %v345, %v26
    %vm348 = vcmp.eq.s32.totalorder %v346, %v26
    %v349 = vshra.s32 %v345, 3
    %v350 = vshra.s32 %v346, 3
    %v351 = vshra.s32 %v26, 3
    %vm352 = vcmp.eq.s32.totalorder %v349, %v351
    %vm353 = vcmp.eq.s32.totalorder %v350, %v351
    %v354 = vand.u32 %v345, 7
    %v355 = vand.u32 %v346, 7
    %vm356 = vcmp.eq.s32.totalorder %v354, 0
    %vm357 = vcmp.eq.s32.totalorder %v355, 0
    %v358 = vand.u32 %v26, 7
    %vm359 = vcmp.eq.s32.totalorder %v358, 0
    %vm360 = vmor %vm356, %vm359
    %vm361 = vmor %vm357, %vm359
    %vm362 = vmand %vm352, %vm360
    %vm363 = vmand %vm353, %vm361
    %vm364 = vmor %vm347, %vm362
    %vm365 = vmor %vm348, %vm363
    %v366 = vsel %vm347, %v336, 0.0
    %v367 = vsel %vm348, %v341, 0.0
    %vm368 = vcmask 130048
    %v369 = vsel %vm368, %v366, 0.0
    %370 = vadd.xlane.f32.xlu0 %v369
    %v371 = vpop.xlane.xlu0 %370
    %v372 = vsel %vm368, %v367, 0.0
    %373 = vadd.xlane.f32.xlu0 %v372
    %v374 = vpop.xlane.xlu0 %373
    %v375 = vadd.f32 %v369, %v372
    %v376 = vrot.slane %v375, 4
    %v377 = vadd.f32 %v375, %v376
    %v378 = vrot.slane %v377, 2
    %v379 = vadd.f32 %v377, %v378
    %v380 = vrot.slane %v379, 1
    %v381 = vadd.f32 %v379, %v380
    %v382 = vmul.f32 %v371, %v381
    %v383 = vmul.f32 %v374, %v381
    %v384 = vrsqrt.pop %v382
    %v385 = vmul.f32 %v382, %v384
    %vm386 = vcmp.eq.f32.partialorder %v382, inf
    %v387 = vsel %vm386, %v382, %v385
    %vm388 = vcmp.eq.f32.partialorder %v382, 0.0
    %v389 = vand.u32 %v382, 2147483648
    %v390 = vsel %vm388, %v389, %v387
    %v391 = vrsqrt.pop %v383
    %v392 = vmul.f32 %v383, %v391
    %vm393 = vcmp.eq.f32.partialorder %v383, inf
    %v394 = vsel %vm393, %v383, %v392
    %vm395 = vcmp.eq.f32.partialorder %v383, 0.0
    %v396 = vand.u32 %v383, 2147483648
    %v397 = vsel %vm395, %v396, %v394
    %v398 = vmax.f32 %v390, 1e-08
    %v399 = vmax.f32 %v397, 1e-08
    %v400 = vrcp.pop %v398
    %v401 = vmul.f32 %v336, %v400
    %v402 = vrcp.pop %v399
    %v403 = vmul.f32 %v341, %v402
    %v404 = vrcp.pop 0.07
    %v405 = vmul.f32 %v401, %v404
    %v406 = vmul.f32 %v403, %v404
    %v407 = vsel %vm364, %v405, -1e+09
    %v408 = vsel %vm365, %v406, -1e+09
    %v409 = vsel %vm368, %v407, -inf
    %410 = vmax.xlane.f32.xlu0 %v409
    %v411 = vpop.xlane.xlu0 %410
    %v412 = vsel %vm368, %v408, -inf
    %413 = vmax.xlane.f32.xlu0 %v412
    %v414 = vpop.xlane.xlu0 %413
    %v415 = vsub.f32 %v407, %v411
    %v416 = vsub.f32 %v408, %v414
    %v417 = vmul.f32 %v415, 1.442695
    %v418 = vpow.pop %v417
    %v419 = vmul.f32 %v416, 1.442695
    %v420 = vpow.pop %v419
    %v421 = vsel %vm368, %v418, 0.0
    %422 = vadd.xlane.f32.xlu0 %v421
    %v423 = vpop.xlane.xlu0 %422
    %v424 = vsel %vm368, %v420, 0.0
    %425 = vadd.xlane.f32.xlu0 %v424
    %v426 = vpop.xlane.xlu0 %425
    %v427 = vlog2.pop %v423
    %v428 = vmul.f32 %v427, 0.6931472
    %v429 = vlog2.pop %v426
    %v430 = vmul.f32 %v429, 0.6931472
    %v431 = vadd.f32 %v411, %v428
    %v432 = vadd.f32 %v414, %v430
    %v433 = vsub.f32 %v407, %v431
    %v434 = vsub.f32 %v408, %v432
    %v435 = vsel %vm347, %v433, 0.0
    %v436 = vsel %vm348, %v434, 0.0
    %v437 = vsel %vm368, %v435, 0.0
    %438 = vadd.xlane.f32.xlu0 %v437
    %v439 = vpop.xlane.xlu0 %438
    %v440 = vsel %vm368, %v436, 0.0
    %441 = vadd.xlane.f32.xlu0 %v440
    %v442 = vpop.xlane.xlu0 %441
    %v443 = vadd.f32 %v439, %v442
    %v444 = vrot.slane %v443, 4
    %v445 = vadd.f32 %v443, %v444
    %v446 = vrot.slane %v445, 2
    %v447 = vadd.f32 %v445, %v446
    %v448 = vrot.slane %v447, 1
    %v449 = vadd.f32 %v447, %v448
    %v450 = vsub.f32 0.0, %v449
    %v451 = vrcp.pop 16.0
    %v452 = vmul.f32 %v450, %v451
    %v453 = vxor.u32 %v261, 2147483648
    %v454 = vxor.u32 %v262, 2147483648
    %v455 = vmul.f32 %v453, 1.442695
    %v456 = vpow.pop %v455
    %v457 = vmul.f32 %v454, 1.442695
    %v458 = vpow.pop %v457
    %v459 = vadd.f32 %v456, 1.0
    %v460 = vadd.f32 %v458, 1.0
    %v461 = vrcp.pop %v459
    %v462 = vmul.f32 1.0, %v461
    %v463 = vrcp.pop %v460
    %v464 = vmul.f32 1.0, %v463
    %vm465 = vcmask 7168
    %466 = vst.msk [vmem:[%s6] sm:$0xff] %vm465, %v462
    %467 = vst.msk [vmem:[%s6 + $0x8] sm:$0xff] %vm465, %v464
    %v468 = vld [vmem:[%s1] sm:$0xff]
    %v469 = vld [vmem:[%s1 + $0x8] sm:$0xff]
    %v470 = vadd.f32 %v462, 1e-10
    %v471 = vadd.f32 %v464, 1e-10
    %v472 = vlog2.pop %v470
    %v473 = vmul.f32 %v472, 0.6931472
    %v474 = vlog2.pop %v471
    %v475 = vmul.f32 %v474, 0.6931472
    %v476 = vmul.f32 %v473, %v468
    %v477 = vmul.f32 %v475, %v469
    %v478 = vsub.f32 1.0, %v462
    %v479 = vsub.f32 1.0, %v464
    %v480 = vadd.f32 %v478, 1e-10
    %v481 = vadd.f32 %v479, 1e-10
    %v482 = vlog2.pop %v480
    %v483 = vmul.f32 %v482, 0.6931472
    %v484 = vlog2.pop %v481
    %v485 = vmul.f32 %v484, 0.6931472
    %v486 = vsub.f32 1.0, %v468
    %v487 = vsub.f32 1.0, %v469
    %v488 = vmul.f32 %v483, %v486
    %v489 = vmul.f32 %v485, %v487
    %v490 = vadd.f32 %v476, %v488
    %v491 = vadd.f32 %v477, %v489
    %v492 = vsub.f32 0.0, %v490
    %v493 = vsub.f32 0.0, %v491
    %v494 = vsel %vm465, %v492, 0.0
    %v495 = vsel %vm465, %v493, 0.0
    %v496 = vadd.f32 %v494, %v495
    %v497 = vrot.slane %v496, 4
    %v498 = vadd.f32 %v496, %v497
    %v499 = vrot.slane %v498, 2
    %v500 = vadd.f32 %v498, %v499
    %v501 = vrot.slane %v500, 1
    %v502 = vadd.f32 %v500, %v501
    %v503 = vmul.f32 %v502, %v451
    %v504 = vadd.f32 %v452, %v503
    %vm505 = vcmask 0
    %506 = vst.msk [vmem:[#allocation2] sm:$0x1] %vm505, %v504
    // Predicated region
    $region22: #{model_with_clr_forward.1} parent=1 // pred_check
      _
    $region23: #{model_with_clr_forward.1} parent=1 // pred_check_branch
      %508 = sbr.rel (0) target = $region25
    $region24: #{model_with_clr_forward.1} parent=1 // pred_region
      %s510 = ssub.s32 16, 16
      %511 = vsyncadd [#allocation3], %s510
      %s513 = sshll.u32 [#allocation2], 4
      %s514 = int_to_ptr.vmem [resolvable:$true] %s513
      %516 = dma.vmem_to_hbm [thread:$0]  %s514, 16, %s5, [#allocation3]
    $region25: #{model_with_clr_forward.1} parent=1 // pred_fallthru
      _
    // Predicated region
    $region26: #{model_with_clr_forward.1} parent=1 // pred_check
      _
    $region27: #{model_with_clr_forward.1} parent=1 // pred_check_branch
      %518 = sbr.rel (0) target = $region29
    $region28: #{model_with_clr_forward.1} parent=1 // pred_region
      _
    $region29: #{model_with_clr_forward.1} parent=1 // pred_fallthru
      _
    // Predicated region
    $region30: #{model_with_clr_forward.1} parent=1 // pred_check
      _
    $region31: #{model_with_clr_forward.1} parent=1 // pred_check_branch
      %520 = sbr.rel (0) target = $region33
    $region32: #{model_with_clr_forward.1} parent=1 // pred_region
      %521 = dma.done [#allocation3], 16
    $region33: #{model_with_clr_forward.1} parent=1 // pred_fallthru
      _
    // Predicated region
    $region34: #{model_with_clr_forward.1} parent=1 // pred_check
      _
    $region35: #{model_with_clr_forward.1} parent=1 // pred_check_branch
      %523 = sbr.rel (0) target = $region37
    $region36: #{model_with_clr_forward.1} parent=1 // pred_region
      _
    $region37: #{model_with_clr_forward.1} parent=1 // pred_fallthru
      _
    %524 = vsyncpa [#allocation3], 1

</llo_original>
